<compile_context>
chip_gen: v7x
topology: tpu7x:2x2x1
jax: 0.10.0
libtpu: 0.0.40
codegen_flags: <defaults>
</compile_context>

<pallas_src>
import functools

import jax
import jax.numpy as jnp
from jax.experimental import pallas as pl
from jax.experimental.pallas import tpu as pltpu


def _round_up(x, m):
    return ((x + m - 1) // m) * m


def _bpr_loss_kernel(pos_ref, neg_ref, out_ref, acc_ref, *, tb, num_valid_rows,
                     mask_rows):
    i = pl.program_id(1)                      # reduction step along batch axis
    last = pl.num_programs(1) - 1

    @pl.when(i == 0)
    def _():
        acc_ref[...] = jnp.zeros_like(acc_ref)

    # Streaming hot path: subtract, numerically-stable log-sigmoid.
    d = pos_ref[...].astype(jnp.float32) - neg_ref[...].astype(jnp.float32)
    # log(sigmoid(d)) = min(d, 0) - log1p(exp(-|d|))   (no underflow to -inf)
    log_sig = jnp.minimum(d, 0.0) - jnp.log1p(jnp.exp(-jnp.abs(d)))

    def fold(x):
        # Fold tb rows into 8 sublanes with VPU-only adds; the trailing (8, td)
        # slabs are tile-aligned so the reshape is a free view. The cross-
        # sublane (XLU) reduce + negation are deferred to the final step.
        return jnp.sum(x.reshape(tb // 8, 8, x.shape[-1]), axis=0)

    if mask_rows:
        # Only the last B tile contains out-of-range (garbage) rows; keep the
        # mask (iota + compare + select) off the hot path of all other steps.
        @pl.when(i < last)
        def _():
            acc_ref[...] += fold(log_sig)

        @pl.when(i == last)
        def _():
            row_ids = i * tb + jax.lax.broadcasted_iota(
                jnp.int32, log_sig.shape, 0)
            acc_ref[...] += fold(
                jnp.where(row_ids < num_valid_rows, log_sig, 0.0))
    else:
        acc_ref[...] += fold(log_sig)

    @pl.when(i == last)
    def _():
        out_ref[...] = (-jnp.sum(acc_ref[...], axis=0, keepdims=True)
                        ).astype(out_ref.dtype)


def bpr_loss(positive, negative, *, tb=4096, td=512, out_dtype=jnp.float32):
    """positive, negative: (B, D).
    Returns (1, D) = -sum(log(sigmoid(pos - neg)), axis=0, keepdims=True)."""
    assert positive.shape == negative.shape and positive.ndim == 2
    B, D = positive.shape

    # Clamp tiles to the problem size while keeping (8, 128) alignment.
    tb = max(8, min(tb, _round_up(B, 8)))
    td = max(128, min(td, _round_up(D, 128)))

    # Guarantee >=2 tiles along the parallel D axis whenever D spans >=2 lane
    # groups, so both v7x TensorCores get work (no effect when D already
    # produces multiple tiles, and no effect on single-core v5e/v6e).
    n_lane_groups = pl.cdiv(D, 128)
    if n_lane_groups >= 2:
        td = min(td, ((n_lane_groups + 1) // 2) * 128)

    mask_rows = (B % tb) != 0
    grid = (pl.cdiv(D, td), pl.cdiv(B, tb))   # (parallel D, reduction B last)

    # Double-buffered working set: 2 inputs x 2 buffers x (tb, td)
    # + (8, td) f32 accumulator (single) + (1, td) output (double-buffered).
    in_bytes = jnp.dtype(positive.dtype).itemsize
    vmem_needed = (2 * 2 * tb * td * in_bytes
                   + 8 * td * 4
                   + 2 * td * jnp.dtype(out_dtype).itemsize)
    # ~1.3x margin, capped at 40 MiB so it is safe on v7x's 64 MiB physical
    # VMEM and trivially fits on v5e/v6e (128 MiB).
    vmem_limit = int(min(max(int(1.3 * vmem_needed), 16 << 20), 40 << 20))

    kernel = functools.partial(_bpr_loss_kernel, tb=tb, num_valid_rows=B,
                               mask_rows=mask_rows)

    out = pl.pallas_call(
        kernel,
        out_shape=jax.ShapeDtypeStruct((1, D), out_dtype),
        grid_spec=pltpu.PrefetchScalarGridSpec(
            num_scalar_prefetch=0,
            grid=grid,
            in_specs=[
                pl.BlockSpec((tb, td), lambda j, i: (i, j)),
                pl.BlockSpec((tb, td), lambda j, i: (i, j)),
            ],
            out_specs=pl.BlockSpec((1, td), lambda j, i: (0, j)),
            scratch_shapes=[pltpu.VMEM((8, td), jnp.float32)],
        ),
        compiler_params=pltpu.CompilerParams(
            dimension_semantics=("parallel", "arbitrary"),
            vmem_limit_bytes=vmem_limit,
        ),
    )(positive, negative)

    return out


def _ref(p, n):
    return -jnp.sum(jnp.log(jax.nn.sigmoid(p - n)), axis=0, keepdims=True)


if __name__ == "__main__":
    key = jax.random.PRNGKey(0)
    kp, kn = jax.random.split(key)

    # Case 1: aligned small shape (batch of 8 score rows over 128 items).
    B, D = 8, 128
    positive = jax.random.normal(kp, (B, D), dtype=jnp.float32)
    negative = jax.random.normal(kn, (B, D), dtype=jnp.float32)
    out = jax.block_until_ready(bpr_loss(positive, negative))
    ref = _ref(positive, negative)
    assert out.shape == (1, D)
    assert jnp.allclose(out, ref, atol=1e-5, rtol=1e-5), "mismatch (aligned)"

    # Case 2: ragged B and D (single B tile, masked rows, partial D edge tile).
    B2, D2 = 20, 200
    p2 = jax.random.normal(kp, (B2, D2), dtype=jnp.float32)
    n2 = jax.random.normal(kn, (B2, D2), dtype=jnp.float32)
    out2 = jax.block_until_ready(bpr_loss(p2, n2))
    ref2 = _ref(p2, n2)
    assert out2.shape == (1, D2)
    assert jnp.allclose(out2, ref2, atol=1e-5, rtol=1e-5), "mismatch (ragged)"

    # Case 3: force a multi-step B reduction with a masked final tile and a
    # partial D edge tile (tb=8 -> 3 reduction steps, last has 4 valid rows).
    out3 = jax.block_until_ready(bpr_loss(p2, n2, tb=8, td=128))
    assert out3.shape == (1, D2)
    assert jnp.allclose(out3, ref2, atol=1e-5, rtol=1e-5), "mismatch (multi-step)"

    print("KERNEL_OK")
</pallas_src>

<mosaic_0001>
module attributes {stable_mosaic.version = 11 : i64} {
  func.func @_bpr_loss_kernel(%arg0: i32, %arg1: i32, %arg2: memref<8x128xf32, #tpu.memory_space<vmem>>, %arg3: memref<8x128xf32, #tpu.memory_space<vmem>>, %arg4: memref<1x128xf32, #tpu.memory_space<vmem>>, %arg5: memref<8x128xf32, #tpu.memory_space<vmem>>) attributes {dimension_semantics = [#tpu.dimension_semantics<parallel>, #tpu.dimension_semantics<arbitrary>], iteration_bounds = array<i64: 1, 1>, scalar_prefetch = 0 : i64, scratch_operands = 1 : i64, tpu.core_type = #tpu.core_type<tc>, window_params = [{transform_indices = @transform_0, window_bounds = array<i64: 8, 128>}, {transform_indices = @transform_1, window_bounds = array<i64: 8, 128>}, {transform_indices = @transform_2, window_bounds = array<i64: 1, 128>}]} {
    %c0_i32 = arith.constant 0 : i32
    %0 = arith.cmpi eq, %arg1, %c0_i32 : i32
    %1 = arith.extui %0 : i1 to i32
    %c0_i32_0 = arith.constant 0 : i32
    %2 = arith.cmpi ne, %1, %c0_i32_0 : i32
    scf.if %2 {
      %cst_12 = arith.constant 0.000000e+00 : f32
      %22 = vector.broadcast %cst_12 : f32 to vector<8x128xf32>
      %c0_13 = arith.constant 0 : index
      %c0_14 = arith.constant 0 : index
      %23 = vector.load %arg5[%c0_13, %c0_14] : memref<8x128xf32, #tpu.memory_space<vmem>>, vector<8x128xf32>
      tpu.vector_store %arg5[%c0_13, %c0_14], %22 {strides = array<i32>} : memref<8x128xf32, #tpu.memory_space<vmem>>, vector<8x128xf32>,
    } else {
    }
    %c0 = arith.constant 0 : index
    %c0_1 = arith.constant 0 : index
    %3 = vector.load %arg2[%c0, %c0_1] : memref<8x128xf32, #tpu.memory_space<vmem>>, vector<8x128xf32>
    %c0_2 = arith.constant 0 : index
    %c0_3 = arith.constant 0 : index
    %4 = vector.load %arg3[%c0_2, %c0_3] : memref<8x128xf32, #tpu.memory_space<vmem>>, vector<8x128xf32>
    %5 = arith.subf %3, %4 : vector<8x128xf32>
    %cst = arith.constant 0.000000e+00 : f32
    %6 = vector.broadcast %cst : f32 to vector<8x128xf32>
    %7 = arith.minimumf %5, %6 : vector<8x128xf32>
    %8 = math.absf %5 : vector<8x128xf32>
    %cst_4 = arith.constant 0.000000e+00 : f32
    %9 = vector.broadcast %cst_4 : f32 to vector<8x128xf32>
    %10 = arith.subf %9, %8 : vector<8x128xf32>
    %11 = math.exp %10 : vector<8x128xf32>
    %12 = math.log1p %11 : vector<8x128xf32>
    %13 = arith.subf %7, %12 : vector<8x128xf32>
    %c0_5 = arith.constant 0 : index
    %c0_6 = arith.constant 0 : index
    %14 = vector.load %arg5[%c0_5, %c0_6] : memref<8x128xf32, #tpu.memory_space<vmem>>, vector<8x128xf32>
    %15 = vector.shape_cast %13 : vector<8x128xf32> to vector<1x8x128xf32>
    %cst_7 = arith.constant dense<0.000000e+00> : vector<8x128xf32>
    %16 = vector.multi_reduction <add>, %15, %cst_7 [0] : vector<1x8x128xf32> to vector<8x128xf32>
    %17 = arith.addf %14, %16 : vector<8x128xf32>
    %c0_8 = arith.constant 0 : index
    %c0_9 = arith.constant 0 : index
    %18 = vector.load %arg5[%c0_8, %c0_9] : memref<8x128xf32, #tpu.memory_space<vmem>>, vector<8x128xf32>
    tpu.vector_store %arg5[%c0_8, %c0_9], %17 {strides = array<i32>} : memref<8x128xf32, #tpu.memory_space<vmem>>, vector<8x128xf32>,
    %c0_i32_10 = arith.constant 0 : i32
    %19 = arith.cmpi eq, %arg1, %c0_i32_10 : i32
    %20 = arith.extui %19 : i1 to i32
    %c0_i32_11 = arith.constant 0 : i32
    %21 = arith.cmpi ne, %20, %c0_i32_11 : i32
    scf.if %21 {
      %c0_12 = arith.constant 0 : index
      %c0_13 = arith.constant 0 : index
      %22 = vector.load %arg5[%c0_12, %c0_13] : memref<8x128xf32, #tpu.memory_space<vmem>>, vector<8x128xf32>
      %cst_14 = arith.constant dense<0.000000e+00> : vector<128xf32>
      %23 = vector.multi_reduction <add>, %22, %cst_14 [0] : vector<8x128xf32> to vector<128xf32>
      %24 = vector.shape_cast %23 : vector<128xf32> to vector<1x128xf32>
      %cst_15 = arith.constant 0.000000e+00 : f32
      %25 = vector.broadcast %cst_15 : f32 to vector<1x128xf32>
      %26 = arith.subf %25, %24 : vector<1x128xf32>
      %c0_16 = arith.constant 0 : index
      %c0_17 = arith.constant 0 : index
      %27 = vector.load %arg4[%c0_16, %c0_17] : memref<1x128xf32, #tpu.memory_space<vmem>>, vector<1x128xf32>
      tpu.vector_store %arg4[%c0_16, %c0_17], %26 {strides = array<i32>} : memref<1x128xf32, #tpu.memory_space<vmem>>, vector<1x128xf32>,
    } else {
    }
    return
  }
  func.func @transform_0(%arg0: i32, %arg1: i32) -> (i32, i32) {
    %c0_i32 = arith.constant 0 : i32
    return %arg1, %arg0 : i32, i32
  }
  func.func @transform_1(%arg0: i32, %arg1: i32) -> (i32, i32) {
    %c0_i32 = arith.constant 0 : i32
    return %arg1, %arg0 : i32, i32
  }
  func.func @transform_2(%arg0: i32, %arg1: i32) -> (i32, i32) {
    %c0_i32 = arith.constant 0 : i32
    %c0_i32_0 = arith.constant 0 : i32
    return %c0_i32, %arg0 : i32, i32
  }
}

</mosaic_0001>

<llo_original>
// kernel: tpu_custom_call.1
$region0: #{tpu_custom_call.1}
  #allocation0 [shape = 'u32[]', space=smem, size = 0x4, offset = 0x4, fixed_abs, tag = 'smem constant byte address 0x4 - core index']
  #allocation1 [shape = 'u32[144,128]{1,0:T(1,128)}', space=vmem, size = 0x12000, scoped, tag = 'internal scratch']
  #allocation2 [shape = 'f32[8,128]{1,0:T(8,128)}', space=vmem, size = 0x1000, scoped, tag = 'scratch operand']
  %s0 = inlined_call_operand.hbm [shape: f32[8,128], index: 0, kind: input, shape index: {}]
  %s1 = inlined_call_operand.hbm [shape: f32[8,128], index: 1, kind: input, shape index: {}]
  %s2 = inlined_call_operand.hbm [shape: f32[1,128], index: 2, kind: output, shape index: {}]
  %s3 = sld [smem:[#allocation0]]
  $region34: #{tpu_custom_call.1} parent=0
    _
  %s5 = ssub.s32 1, %s3
  %s6 = scalar_select 0, %s5, %s3
  $region1: #{tpu_custom_call.1} parent=0
    #allocation3 [shape = 'u8[4096]{0}', space=vmem, size = 0x1000, scoped, tag = 'input window, operand 0, single buffered']
    #allocation4 [shape = 's32[1]{0}', space=sflag, size = 0x4, scoped, tag = 'scoped memory for tpu_custom_call.1']
    #allocation5 [shape = 's32[1]{0}', space=sflag, size = 0x4, scoped, tag = 'scoped memory for tpu_custom_call.1']
    #allocation6 [shape = 'u8[4096]{0}', space=vmem, size = 0x1000, scoped, tag = 'input window, operand 1, single buffered']
    #allocation7 [shape = 's32[1]{0}', space=sflag, size = 0x4, scoped, tag = 'scoped memory for tpu_custom_call.1']
    #allocation8 [shape = 'u8[512]{0}', space=vmem, size = 0x400, scoped, tag = 'output window, operand 0, single buffered']
    %7 = vsyncpa [#allocation4], 0
    %8 = vsyncpa [#allocation7], 0
    %9 = vsyncpa [#allocation5], 0
    // Predicated region
    $region2: #{tpu_custom_call.1} parent=1 // pred_check
      _
    $region3: #{tpu_custom_call.1} parent=1 // pred_check_branch
      %11 = sbr.rel (0) target = $region5
    $region4: #{tpu_custom_call.1} parent=1 // pred_region
      %s13 = ssub.s32 128, 128
      %14 = vsyncadd [#allocation4], %s13
      %s16 = sshll.u32 [#allocation3], 4
      %s17 = int_to_ptr.vmem [resolvable:$true] %s16
      %19 = dma.hbm_to_vmem [thread:$0]  %s0, 128, %s17, [#allocation4]
    $region5: #{tpu_custom_call.1} parent=1 // pred_fallthru
      _
    // Predicated region
    $region6: #{tpu_custom_call.1} parent=1 // pred_check
      _
    $region7: #{tpu_custom_call.1} parent=1 // pred_check_branch
      %21 = sbr.rel (0) target = $region9
    $region8: #{tpu_custom_call.1} parent=1 // pred_region
      %s23 = ssub.s32 128, 128
      %24 = vsyncadd [#allocation7], %s23
      %s26 = sshll.u32 [#allocation6], 4
      %s27 = int_to_ptr.vmem [resolvable:$true] %s26
      %29 = dma.hbm_to_vmem [thread:$0]  %s1, 128, %s27, [#allocation7]
    $region9: #{tpu_custom_call.1} parent=1 // pred_fallthru
      _
    // Predicated region
    $region10: #{tpu_custom_call.1} parent=1 // pred_check
      _
    $region11: #{tpu_custom_call.1} parent=1 // pred_check_branch
      %31 = sbr.rel (0) target = $region13
    $region12: #{tpu_custom_call.1} parent=1 // pred_region
      %32 = dma.done [#allocation4], 128
    $region13: #{tpu_custom_call.1} parent=1 // pred_fallthru
      _
    // Predicated region
    $region14: #{tpu_custom_call.1} parent=1 // pred_check
      _
    $region15: #{tpu_custom_call.1} parent=1 // pred_check_branch
      %34 = sbr.rel (0) target = $region17
    $region16: #{tpu_custom_call.1} parent=1 // pred_region
      %35 = dma.done [#allocation7], 128
    $region17: #{tpu_custom_call.1} parent=1 // pred_fallthru
      _
    %p36 = scmp.eq.s32.totalorder 0, 0
    // Predicated region
    $region18: #{tpu_custom_call.1} parent=1 // pred_check
      %p37 = pneg %p36
    $region19: #{tpu_custom_call.1} parent=1 // pred_check_branch
      %39 = sbr.rel (%p37) target = $region21
    $region20: #{tpu_custom_call.1} parent=1 // pred_region
      %40 = vst [vmem:[#allocation2] sm:$0xff] 0.0
    $region21: #{tpu_custom_call.1} parent=1 // pred_fallthru
      _
    %v41 = vld [vmem:[#allocation3] sm:$0xff]
    %v42 = vld [vmem:[#allocation6] sm:$0xff]
    %v43 = vsub.f32 %v41, %v42
    %v44 = vmin.f32 %v43, 0.0
    %v45 = vand.u32 2147483647, %v43
    %v46 = vsub.f32 0.0, %v45
    %v47 = vmul.f32 %v46, 1.442695
    %v48 = vpow.pop %v47
    %v49 = vadd.f32 %v48, 1.0
    %v50 = vlog2.pop %v49
    %v51 = vmul.f32 %v50, 0.6931472
    %v52 = vmul.f32 -0.5, %v48
    %v53 = vadd.f32 %v52, 1.0
    %v54 = vmul.f32 %v53, %v48
    %v55 = vand.u32 2147483647, %v48
    %vm56 = vcmp.lt.f32.partialorder %v55, 0.0004427343
    %v57 = vsel %vm56, %v54, %v51
    %v58 = vsub.f32 %v44, %v57
    %v59 = vld [vmem:[#allocation2] sm:$0xff]
    %v60 = vadd.f32 %v58, 0.0
    %v61 = vadd.f32 %v59, %v60
    %62 = vst [vmem:[#allocation2] sm:$0xff] %v61
    // Predicated region
    $region22: #{tpu_custom_call.1} parent=1 // pred_check
      %p63 = pneg %p36
    $region23: #{tpu_custom_call.1} parent=1 // pred_check_branch
      %65 = sbr.rel (%p63) target = $region25
    $region24: #{tpu_custom_call.1} parent=1 // pred_region
      %v66 = vld [vmem:[#allocation2] sm:$0xff]
      %v67 = vrot.slane %v66, 4
      %v68 = vadd.f32 %v66, %v67
      %v69 = vrot.slane %v68, 2
      %v70 = vadd.f32 %v68, %v69
      %v71 = vrot.slane %v70, 1
      %v72 = vadd.f32 %v70, %v71
      %v73 = vsub.f32 0.0, %v72
      %74 = vst [vmem:[#allocation8] sm:$0x1] %v73
    $region25: #{tpu_custom_call.1} parent=1 // pred_fallthru
      _
    // Predicated region
    $region26: #{tpu_custom_call.1} parent=1 // pred_check
      _
    $region27: #{tpu_custom_call.1} parent=1 // pred_check_branch
      %76 = sbr.rel (0) target = $region29
    $region28: #{tpu_custom_call.1} parent=1 // pred_region
      %s78 = ssub.s32 16, 16
      %79 = vsyncadd [#allocation5], %s78
      %s81 = sshll.u32 [#allocation8], 4
      %s82 = int_to_ptr.vmem [resolvable:$true] %s81
      %84 = dma.vmem_to_hbm [thread:$0]  %s82, 16, %s2, [#allocation5]
    $region29: #{tpu_custom_call.1} parent=1 // pred_fallthru
      _
    // Predicated region
    $region30: #{tpu_custom_call.1} parent=1 // pred_check
      _
    $region31: #{tpu_custom_call.1} parent=1 // pred_check_branch
      %86 = sbr.rel (0) target = $region33
    $region32: #{tpu_custom_call.1} parent=1 // pred_region
      %87 = dma.done [#allocation5], 16
    $region33: #{tpu_custom_call.1} parent=1 // pred_fallthru
      _
    %88 = vsyncpa [#allocation4], 1
    %89 = vsyncpa [#allocation7], 1
    %90 = vsyncpa [#allocation5], 1

</llo_original>
